<compile_context>
chip_gen: v6e
topology: v6e:2x2x1
jax: 0.10.0
libtpu: 0.0.40
codegen_flags: <defaults>
</compile_context>

<pallas_src>
import functools
import math

import jax
import jax.numpy as jnp
from jax.experimental import pallas as pl
from jax.experimental.pallas import tpu as pltpu

_HALF_LOG_2PI = 0.5 * math.log(2.0 * math.pi)


def _round_up(x, m):
    return ((x + m - 1) // m) * m


def _recip(x):
    # Full-precision 1/x from ONE EUP approx reciprocal + one Newton step (pure VPU).
    r = pl.reciprocal(x, approx=True)
    return r * (2.0 - x * r)


def _shift_up(x, shift):
    """Argument-shift corrections for digamma/lgamma, x >= 1.

    Returns (x + shift, sum_{i<shift} 1/(x+i), prod_{i<shift} (x+i)) using a single EUP
    reciprocal (numerator of the reciprocal-sum is a pure-VPU polynomial) regardless of
    shift depth.  For shift == 0 returns (x, None, None).
    """
    if shift == 0:
        return x, None, None
    terms = [x] + [x + float(i) for i in range(1, shift)]
    den = terms[0]
    for t in terms[1:]:
        den = den * t
    if shift == 1:
        recip_sum = _recip(den)
    else:
        num = None
        for i in range(shift):
            p = None
            for j in range(shift):
                if j != i:
                    p = terms[j] if p is None else p * terms[j]
            num = p if num is None else num + p
        recip_sum = num * _recip(den)
    return x + float(shift), recip_sum, den


def _digamma_ge1(x, shift):
    # digamma(x) for x >= 1: psi(x) = psi(x+shift) - sum 1/(x+i), asymptotic series.
    xs, corr, _ = _shift_up(x, shift)
    inv = _recip(xs)
    inv2 = inv * inv
    dg = (jnp.log(xs) - 0.5 * inv
          - inv2 * (1.0 / 12.0 - inv2 * (1.0 / 120.0
                    - inv2 * (1.0 / 252.0 - inv2 * (1.0 / 240.0)))))
    return dg if corr is None else dg - corr


def _digamma_lgamma_ge1(x, shift):
    # Fused digamma(x) + lgamma(x) for x >= 1.  Shares the shift product, recip(xs) and
    # log(xs) between the two series: 4 EUP ops total (2 when shift == 0).
    xs, corr, den = _shift_up(x, shift)
    inv = _recip(xs)
    inv2 = inv * inv
    lx = jnp.log(xs)
    dg = (lx - 0.5 * inv
          - inv2 * (1.0 / 12.0 - inv2 * (1.0 / 120.0
                    - inv2 * (1.0 / 252.0 - inv2 * (1.0 / 240.0)))))
    lg = ((xs - 0.5) * lx - xs + _HALF_LOG_2PI
          + inv * (1.0 / 12.0 - inv2 * (1.0 / 360.0
                   - inv2 * (1.0 / 1260.0 - inv2 * (1.0 / 1680.0)))))
    if corr is not None:
        dg = dg - corr
        lg = lg - jnp.log(den)
    return dg, lg


def _edl_kernel(ann_ref, logits_ref, tgt_ref, loss_ref, *,
                num_classes, lgamma_c, e_shift, s_shift):
    x = logits_ref[...]                          # (C, TN) f32 — classes on sublanes
    c, tn = x.shape
    tgt = tgt_ref[...]                           # (1, TN) i32
    ann = ann_ref[0, 0]                          # annealing coefficient (SMEM scalar)

    # one_hot(target) with classes on the sublane axis.
    cls = jax.lax.broadcasted_iota(jnp.int32, (c, tn), 0)
    y = (cls == tgt).astype(jnp.float32)         # (C, TN)
    not_y = 1.0 - y

    # evidence = relu(output); alpha = evidence + 1   (alpha >= 1 always)
    evidence = jnp.maximum(x, 0.0)
    alpha = evidence + 1.0
    S = jnp.sum(alpha, axis=0, keepdims=True)    # (1, TN), >= C

    # Elementwise transcendentals, computed ONCE (fused) and reused for the KL term.
    dg_alpha, lg_alpha = _digamma_lgamma_ge1(alpha, e_shift)   # (C, TN)

    # A = sum_c y*(digamma(S) - digamma(alpha)) = digamma(S) - digamma(alpha[target]).
    A = _digamma_ge1(S, s_shift) - jnp.sum(y * dg_alpha, axis=0, keepdims=True)

    # KL(Dir(kl_alpha) || Dir(1)); kl_alpha == alpha where y==0 and == 1 where y==1.
    e_m = evidence * not_y                                     # kl_alpha - 1
    sum_em = jnp.sum(e_m, axis=0, keepdims=True)
    sum_ka = sum_em + float(num_classes)                       # (1, TN), >= C
    dg_ska, lg_ska = _digamma_lgamma_ge1(sum_ka, s_shift)

    # lgamma(kl_alpha) == (1 - y) * lgamma(alpha)   (lgamma(1) == 0 on target lanes)
    first = lg_ska - jnp.sum(not_y * lg_alpha, axis=0, keepdims=True) - lgamma_c
    # digamma(kl_alpha) -> dg_alpha is exact here: (kl_alpha - 1) == 0 where y==1.
    second = jnp.sum(e_m * dg_alpha, axis=0, keepdims=True) - dg_ska * sum_em

    loss_ref[...] = A + ann * (first + second)                 # (1, TN) lane-dense


def edl_digamma_loss(output, target, epoch_num, num_classes,
                     annealing_step=10, tile_n_max=4096):
    n, c = output.shape
    assert c == num_classes

    # Samples go on the lane axis: tile is a multiple of 128, as large as practical.
    n128 = _round_up(n, 128)
    tile_n = min(tile_n_max, n128)
    if n128 // tile_n < 2 and tile_n % 256 == 0:
        tile_n //= 2            # keep >= 2 grid steps so both v7x TensorCores get work
    n_pad = _round_up(n, tile_n)
    grid = n_pad // tile_n

    x = output.astype(jnp.float32)
    tgt = target.astype(jnp.int32)
    if n_pad != n:              # pad (padded columns are sliced off before the mean)
        x = jnp.pad(x, ((0, n_pad - n), (0, 0)))
        tgt = jnp.pad(tgt, (0, n_pad - n))
    x_t = x.T                   # (C, N_pad): classes on sublanes, samples on lanes
    tgt2d = tgt.reshape(1, n_pad)

    ann = jnp.minimum(jnp.float32(1.0),
                      jnp.float32(epoch_num) / jnp.float32(annealing_step)).reshape(1, 1)

    kernel = functools.partial(
        _edl_kernel,
        num_classes=num_classes,
        lgamma_c=float(math.lgamma(num_classes)),
        e_shift=2,                              # alpha >= 1  -> shifted arg >= 3
        s_shift=max(0, 3 - num_classes),        # S, sum_ka >= C -> shifted arg >= 3
    )

    per_sample = pl.pallas_call(
        kernel,
        grid=(grid,),
        in_specs=[
            pl.BlockSpec(memory_space=pltpu.MemorySpace.SMEM),   # annealing coef (1,1)
            pl.BlockSpec((c, tile_n), lambda i: (0, i)),         # logits (C, N_pad)
            pl.BlockSpec((1, tile_n), lambda i: (0, i)),         # targets (1, N_pad)
        ],
        out_specs=pl.BlockSpec((1, tile_n), lambda i: (0, i)),   # per-sample loss
        out_shape=jax.ShapeDtypeStruct((1, n_pad), jnp.float32),
        compiler_params=pltpu.CompilerParams(dimension_semantics=("parallel",)),
    )(ann, x_t, tgt2d)

    # torch.mean over the (N, 1) per-sample loss — tiny O(N) epilogue in plain JAX.
    return jnp.mean(per_sample[0, :n])


def _reference(output, target, epoch_num, num_classes, annealing_step=10):
    from jax.scipy.special import digamma, gammaln
    output = output.astype(jnp.float32)
    alpha = jnp.maximum(output, 0.0) + 1.0
    y = jax.nn.one_hot(target, num_classes, dtype=jnp.float32)
    S = jnp.sum(alpha, axis=1, keepdims=True)
    A = jnp.sum(y * (digamma(S) - digamma(alpha)), axis=1, keepdims=True)
    ann = jnp.minimum(jnp.float32(1.0), jnp.float32(epoch_num / annealing_step))
    kl_alpha = (alpha - 1.0) * (1.0 - y) + 1.0
    ska = jnp.sum(kl_alpha, axis=1, keepdims=True)
    first = (gammaln(ska) - jnp.sum(gammaln(kl_alpha), axis=1, keepdims=True)
             - gammaln(jnp.float32(num_classes)))
    second = jnp.sum((kl_alpha - 1.0) * (digamma(kl_alpha) - digamma(ska)),
                     axis=1, keepdims=True)
    return jnp.mean(A + ann * (first + second))


if __name__ == "__main__":
    num_classes = 4
    n = 16
    epoch_num = 3

    key = jax.random.PRNGKey(0)
    k1, k2 = jax.random.split(key)
    output = 2.0 * jax.random.normal(k1, (n, num_classes), dtype=jnp.float32)
    target = jax.random.randint(k2, (n,), 0, num_classes, dtype=jnp.int32)

    loss = edl_digamma_loss(output, target, epoch_num, num_classes)
    loss = jax.block_until_ready(loss)

    ref = _reference(output, target, epoch_num, num_classes)
    assert jnp.allclose(loss, ref, rtol=2e-3, atol=5e-4), (loss, ref)
    print("KERNEL_OK")
</pallas_src>

<mosaic_0001>
module attributes {stable_mosaic.version = 11 : i64} {
  func.func @_edl_kernel(%arg0: i32, %arg1: memref<1x1xf32, #tpu.memory_space<smem>>, %arg2: memref<4x128xf32, #tpu.memory_space<vmem>>, %arg3: memref<1x128xi32, #tpu.memory_space<vmem>>, %arg4: memref<1x128xf32, #tpu.memory_space<vmem>>) attributes {dimension_semantics = [#tpu.dimension_semantics<parallel>], iteration_bounds = array<i64: 1>, scalar_prefetch = 0 : i64, scratch_operands = 0 : i64, tpu.core_type = #tpu.core_type<tc>, window_params = [{transform_indices = @transform_0, window_bounds = array<i64: 1, 1>}, {transform_indices = @transform_1, window_bounds = array<i64: 4, 128>}, {transform_indices = @transform_2, window_bounds = array<i64: 1, 128>}, {transform_indices = @transform_3, window_bounds = array<i64: 1, 128>}]} {
    %c0 = arith.constant 0 : index
    %c0_0 = arith.constant 0 : index
    %0 = vector.load %arg2[%c0, %c0_0] : memref<4x128xf32, #tpu.memory_space<vmem>>, vector<4x128xf32>
    %c0_1 = arith.constant 0 : index
    %c0_2 = arith.constant 0 : index
    %1 = vector.load %arg3[%c0_1, %c0_2] : memref<1x128xi32, #tpu.memory_space<vmem>>, vector<1x128xi32>
    %c0_3 = arith.constant 0 : index
    %c0_4 = arith.constant 0 : index
    %2 = memref.load %arg1[%c0_3, %c0_4] : memref<1x1xf32, #tpu.memory_space<smem>>
    %3 = tpu.iota {dimensions = array<i32: 0>} : vector<4x128xi32>
    %4 = vector.broadcast %1 : vector<1x128xi32> to vector<4x128xi32>
    %5 = arith.cmpi eq, %3, %4 : vector<4x128xi32>
    %6 = arith.extui %5 : vector<4x128xi1> to vector<4x128xi32>
    %7 = arith.sitofp %6 : vector<4x128xi32> to vector<4x128xf32>
    %cst = arith.constant 1.000000e+00 : f32
    %8 = vector.broadcast %cst : f32 to vector<4x128xf32>
    %9 = arith.subf %8, %7 : vector<4x128xf32>
    %cst_5 = arith.constant 0.000000e+00 : f32
    %10 = vector.broadcast %cst_5 : f32 to vector<4x128xf32>
    %11 = arith.maximumf %0, %10 : vector<4x128xf32>
    %cst_6 = arith.constant 1.000000e+00 : f32
    %12 = vector.broadcast %cst_6 : f32 to vector<4x128xf32>
    %13 = arith.addf %11, %12 : vector<4x128xf32>
    %cst_7 = arith.constant dense<0.000000e+00> : vector<128xf32>
    %14 = vector.multi_reduction <add>, %13, %cst_7 [0] : vector<4x128xf32> to vector<128xf32>
    %15 = vector.shape_cast %14 : vector<128xf32> to vector<1x128xf32>
    %cst_8 = arith.constant 1.000000e+00 : f32
    %16 = vector.broadcast %cst_8 : f32 to vector<4x128xf32>
    %17 = arith.addf %13, %16 : vector<4x128xf32>
    %18 = arith.mulf %13, %17 : vector<4x128xf32>
    %19 = arith.addf %17, %13 : vector<4x128xf32>
    %20 = tpu.reciprocal %18 {approx = true} : vector<4x128xf32> -> vector<4x128xf32>
    %21 = arith.mulf %18, %20 : vector<4x128xf32>
    %cst_9 = arith.constant 2.000000e+00 : f32
    %22 = vector.broadcast %cst_9 : f32 to vector<4x128xf32>
    %23 = arith.subf %22, %21 : vector<4x128xf32>
    %24 = arith.mulf %20, %23 : vector<4x128xf32>
    %25 = arith.mulf %19, %24 : vector<4x128xf32>
    %cst_10 = arith.constant 2.000000e+00 : f32
    %26 = vector.broadcast %cst_10 : f32 to vector<4x128xf32>
    %27 = arith.addf %13, %26 : vector<4x128xf32>
    %28 = tpu.reciprocal %27 {approx = true} : vector<4x128xf32> -> vector<4x128xf32>
    %29 = arith.mulf %27, %28 : vector<4x128xf32>
    %cst_11 = arith.constant 2.000000e+00 : f32
    %30 = vector.broadcast %cst_11 : f32 to vector<4x128xf32>
    %31 = arith.subf %30, %29 : vector<4x128xf32>
    %32 = arith.mulf %28, %31 : vector<4x128xf32>
    %33 = arith.mulf %32, %32 : vector<4x128xf32>
    %34 = math.log %27 : vector<4x128xf32>
    %cst_12 = arith.constant 5.000000e-01 : f32
    %35 = vector.broadcast %cst_12 : f32 to vector<4x128xf32>
    %36 = arith.mulf %35, %32 : vector<4x128xf32>
    %37 = arith.subf %34, %36 : vector<4x128xf32>
    %cst_13 = arith.constant 0.00416666688 : f32
    %38 = vector.broadcast %cst_13 : f32 to vector<4x128xf32>
    %39 = arith.mulf %33, %38 : vector<4x128xf32>
    %cst_14 = arith.constant 0.0039682542 : f32
    %40 = vector.broadcast %cst_14 : f32 to vector<4x128xf32>
    %41 = arith.subf %40, %39 : vector<4x128xf32>
    %42 = arith.mulf %33, %41 : vector<4x128xf32>
    %cst_15 = arith.constant 0.00833333377 : f32
    %43 = vector.broadcast %cst_15 : f32 to vector<4x128xf32>
    %44 = arith.subf %43, %42 : vector<4x128xf32>
    %45 = arith.mulf %33, %44 : vector<4x128xf32>
    %cst_16 = arith.constant 0.0833333358 : f32
    %46 = vector.broadcast %cst_16 : f32 to vector<4x128xf32>
    %47 = arith.subf %46, %45 : vector<4x128xf32>
    %48 = arith.mulf %33, %47 : vector<4x128xf32>
    %49 = arith.subf %37, %48 : vector<4x128xf32>
    %cst_17 = arith.constant 5.000000e-01 : f32
    %50 = vector.broadcast %cst_17 : f32 to vector<4x128xf32>
    %51 = arith.subf %27, %50 : vector<4x128xf32>
    %52 = arith.mulf %51, %34 : vector<4x128xf32>
    %53 = arith.subf %52, %27 : vector<4x128xf32>
    %cst_18 = arith.constant 0.918938517 : f32
    %54 = vector.broadcast %cst_18 : f32 to vector<4x128xf32>
    %55 = arith.addf %53, %54 : vector<4x128xf32>
    %cst_19 = arith.constant 5.95238118E-4 : f32
    %56 = vector.broadcast %cst_19 : f32 to vector<4x128xf32>
    %57 = arith.mulf %33, %56 : vector<4x128xf32>
    %cst_20 = arith.constant 7.93650805E-4 : f32
    %58 = vector.broadcast %cst_20 : f32 to vector<4x128xf32>
    %59 = arith.subf %58, %57 : vector<4x128xf32>
    %60 = arith.mulf %33, %59 : vector<4x128xf32>
    %cst_21 = arith.constant 0.00277777785 : f32
    %61 = vector.broadcast %cst_21 : f32 to vector<4x128xf32>
    %62 = arith.subf %61, %60 : vector<4x128xf32>
    %63 = arith.mulf %33, %62 : vector<4x128xf32>
    %cst_22 = arith.constant 0.0833333358 : f32
    %64 = vector.broadcast %cst_22 : f32 to vector<4x128xf32>
    %65 = arith.subf %64, %63 : vector<4x128xf32>
    %66 = arith.mulf %32, %65 : vector<4x128xf32>
    %67 = arith.addf %55, %66 : vector<4x128xf32>
    %68 = arith.subf %49, %25 : vector<4x128xf32>
    %69 = math.log %18 : vector<4x128xf32>
    %70 = arith.subf %67, %69 : vector<4x128xf32>
    %71 = tpu.reciprocal %15 {approx = true} : vector<1x128xf32> -> vector<1x128xf32>
    %72 = arith.mulf %15, %71 : vector<1x128xf32>
    %cst_23 = arith.constant 2.000000e+00 : f32
    %73 = vector.broadcast %cst_23 : f32 to vector<1x128xf32>
    %74 = arith.subf %73, %72 : vector<1x128xf32>
    %75 = arith.mulf %71, %74 : vector<1x128xf32>
    %76 = arith.mulf %75, %75 : vector<1x128xf32>
    %77 = math.log %15 : vector<1x128xf32>
    %cst_24 = arith.constant 5.000000e-01 : f32
    %78 = vector.broadcast %cst_24 : f32 to vector<1x128xf32>
    %79 = arith.mulf %78, %75 : vector<1x128xf32>
    %80 = arith.subf %77, %79 : vector<1x128xf32>
    %cst_25 = arith.constant 0.00416666688 : f32
    %81 = vector.broadcast %cst_25 : f32 to vector<1x128xf32>
    %82 = arith.mulf %76, %81 : vector<1x128xf32>
    %cst_26 = arith.constant 0.0039682542 : f32
    %83 = vector.broadcast %cst_26 : f32 to vector<1x128xf32>
    %84 = arith.subf %83, %82 : vector<1x128xf32>
    %85 = arith.mulf %76, %84 : vector<1x128xf32>
    %cst_27 = arith.constant 0.00833333377 : f32
    %86 = vector.broadcast %cst_27 : f32 to vector<1x128xf32>
    %87 = arith.subf %86, %85 : vector<1x128xf32>
    %88 = arith.mulf %76, %87 : vector<1x128xf32>
    %cst_28 = arith.constant 0.0833333358 : f32
    %89 = vector.broadcast %cst_28 : f32 to vector<1x128xf32>
    %90 = arith.subf %89, %88 : vector<1x128xf32>
    %91 = arith.mulf %76, %90 : vector<1x128xf32>
    %92 = arith.subf %80, %91 : vector<1x128xf32>
    %93 = arith.mulf %7, %68 : vector<4x128xf32>
    %cst_29 = arith.constant dense<0.000000e+00> : vector<128xf32>
    %94 = vector.multi_reduction <add>, %93, %cst_29 [0] : vector<4x128xf32> to vector<128xf32>
    %95 = vector.shape_cast %94 : vector<128xf32> to vector<1x128xf32>
    %96 = arith.subf %92, %95 : vector<1x128xf32>
    %97 = arith.mulf %11, %9 : vector<4x128xf32>
    %cst_30 = arith.constant dense<0.000000e+00> : vector<128xf32>
    %98 = vector.multi_reduction <add>, %97, %cst_30 [0] : vector<4x128xf32> to vector<128xf32>
    %99 = vector.shape_cast %98 : vector<128xf32> to vector<1x128xf32>
    %cst_31 = arith.constant 4.000000e+00 : f32
    %100 = vector.broadcast %cst_31 : f32 to vector<1x128xf32>
    %101 = arith.addf %99, %100 : vector<1x128xf32>
    %102 = tpu.reciprocal %101 {approx = true} : vector<1x128xf32> -> vector<1x128xf32>
    %103 = arith.mulf %101, %102 : vector<1x128xf32>
    %cst_32 = arith.constant 2.000000e+00 : f32
    %104 = vector.broadcast %cst_32 : f32 to vector<1x128xf32>
    %105 = arith.subf %104, %103 : vector<1x128xf32>
    %106 = arith.mulf %102, %105 : vector<1x128xf32>
    %107 = arith.mulf %106, %106 : vector<1x128xf32>
    %108 = math.log %101 : vector<1x128xf32>
    %cst_33 = arith.constant 5.000000e-01 : f32
    %109 = vector.broadcast %cst_33 : f32 to vector<1x128xf32>
    %110 = arith.mulf %109, %106 : vector<1x128xf32>
    %111 = arith.subf %108, %110 : vector<1x128xf32>
    %cst_34 = arith.constant 0.00416666688 : f32
    %112 = vector.broadcast %cst_34 : f32 to vector<1x128xf32>
    %113 = arith.mulf %107, %112 : vector<1x128xf32>
    %cst_35 = arith.constant 0.0039682542 : f32
    %114 = vector.broadcast %cst_35 : f32 to vector<1x128xf32>
    %115 = arith.subf %114, %113 : vector<1x128xf32>
    %116 = arith.mulf %107, %115 : vector<1x128xf32>
    %cst_36 = arith.constant 0.00833333377 : f32
    %117 = vector.broadcast %cst_36 : f32 to vector<1x128xf32>
    %118 = arith.subf %117, %116 : vector<1x128xf32>
    %119 = arith.mulf %107, %118 : vector<1x128xf32>
    %cst_37 = arith.constant 0.0833333358 : f32
    %120 = vector.broadcast %cst_37 : f32 to vector<1x128xf32>
    %121 = arith.subf %120, %119 : vector<1x128xf32>
    %122 = arith.mulf %107, %121 : vector<1x128xf32>
    %123 = arith.subf %111, %122 : vector<1x128xf32>
    %cst_38 = arith.constant 5.000000e-01 : f32
    %124 = vector.broadcast %cst_38 : f32 to vector<1x128xf32>
    %125 = arith.subf %101, %124 : vector<1x128xf32>
    %126 = arith.mulf %125, %108 : vector<1x128xf32>
    %127 = arith.subf %126, %101 : vector<1x128xf32>
    %cst_39 = arith.constant 0.918938517 : f32
    %128 = vector.broadcast %cst_39 : f32 to vector<1x128xf32>
    %129 = arith.addf %127, %128 : vector<1x128xf32>
    %cst_40 = arith.constant 5.95238118E-4 : f32
    %130 = vector.broadcast %cst_40 : f32 to vector<1x128xf32>
    %131 = arith.mulf %107, %130 : vector<1x128xf32>
    %cst_41 = arith.constant 7.93650805E-4 : f32
    %132 = vector.broadcast %cst_41 : f32 to vector<1x128xf32>
    %133 = arith.subf %132, %131 : vector<1x128xf32>
    %134 = arith.mulf %107, %133 : vector<1x128xf32>
    %cst_42 = arith.constant 0.00277777785 : f32
    %135 = vector.broadcast %cst_42 : f32 to vector<1x128xf32>
    %136 = arith.subf %135, %134 : vector<1x128xf32>
    %137 = arith.mulf %107, %136 : vector<1x128xf32>
    %cst_43 = arith.constant 0.0833333358 : f32
    %138 = vector.broadcast %cst_43 : f32 to vector<1x128xf32>
    %139 = arith.subf %138, %137 : vector<1x128xf32>
    %140 = arith.mulf %106, %139 : vector<1x128xf32>
    %141 = arith.addf %129, %140 : vector<1x128xf32>
    %142 = arith.mulf %9, %70 : vector<4x128xf32>
    %cst_44 = arith.constant dense<0.000000e+00> : vector<128xf32>
    %143 = vector.multi_reduction <add>, %142, %cst_44 [0] : vector<4x128xf32> to vector<128xf32>
    %144 = vector.shape_cast %143 : vector<128xf32> to vector<1x128xf32>
    %145 = arith.subf %141, %144 : vector<1x128xf32>
    %cst_45 = arith.constant 1.79175949 : f32
    %146 = vector.broadcast %cst_45 : f32 to vector<1x128xf32>
    %147 = arith.subf %145, %146 : vector<1x128xf32>
    %148 = arith.mulf %97, %68 : vector<4x128xf32>
    %cst_46 = arith.constant dense<0.000000e+00> : vector<128xf32>
    %149 = vector.multi_reduction <add>, %148, %cst_46 [0] : vector<4x128xf32> to vector<128xf32>
    %150 = vector.shape_cast %149 : vector<128xf32> to vector<1x128xf32>
    %151 = arith.mulf %123, %99 : vector<1x128xf32>
    %152 = arith.subf %150, %151 : vector<1x128xf32>
    %153 = arith.addf %147, %152 : vector<1x128xf32>
    %154 = vector.broadcast %2 : f32 to vector<1x128xf32>
    %155 = arith.mulf %154, %153 : vector<1x128xf32>
    %156 = arith.addf %96, %155 : vector<1x128xf32>
    %c0_47 = arith.constant 0 : index
    %c0_48 = arith.constant 0 : index
    %157 = vector.load %arg4[%c0_47, %c0_48] : memref<1x128xf32, #tpu.memory_space<vmem>>, vector<1x128xf32>
    tpu.vector_store %arg4[%c0_47, %c0_48], %156 {strides = array<i32>} : memref<1x128xf32, #tpu.memory_space<vmem>>, vector<1x128xf32>,
    return
  }
  func.func @transform_0(%arg0: i32) -> (i32, i32) {
    %c0_i32 = arith.constant 0 : i32
    %c0_i32_0 = arith.constant 0 : i32
    %c0_i32_1 = arith.constant 0 : i32
    return %c0_i32, %c0_i32_0 : i32, i32
  }
  func.func @transform_1(%arg0: i32) -> (i32, i32) {
    %c0_i32 = arith.constant 0 : i32
    %c0_i32_0 = arith.constant 0 : i32
    return %c0_i32, %arg0 : i32, i32
  }
  func.func @transform_2(%arg0: i32) -> (i32, i32) {
    %c0_i32 = arith.constant 0 : i32
    %c0_i32_0 = arith.constant 0 : i32
    return %c0_i32, %arg0 : i32, i32
  }
  func.func @transform_3(%arg0: i32) -> (i32, i32) {
    %c0_i32 = arith.constant 0 : i32
    %c0_i32_0 = arith.constant 0 : i32
    return %c0_i32, %arg0 : i32, i32
  }
}

</mosaic_0001>

<llo_original>
// kernel: tpu_custom_call.1
$region0: #{tpu_custom_call.1}
  #allocation0 [shape = 'u32[]', space=smem, size = 0x4, offset = 0x4, fixed_abs, tag = 'smem constant byte address 0x4 - core index']
  #allocation1 [shape = 'u32[144,128]{1,0:T(1,128)}', space=vmem, size = 0x12000, scoped, tag = 'internal scratch']
  #allocation2 [shape = 'f32[1,1]{1,0:T(1,128)S(6)}', space=smem, size = 0x200, scoped, tag = 'scoped memory for tpu_custom_call.1']
  %s0 = inlined_call_operand.<no memory space> [shape: f32[1,1], index: 0, kind: input, shape index: {}]
  %s1 = inlined_call_operand.hbm [shape: f32[4,128], index: 1, kind: input, shape index: {}]
  %s2 = inlined_call_operand.vmem [shape: s32[1,128], index: 2, kind: input, shape index: {}]
  %s3 = inlined_call_operand.hbm [shape: f32[1,128], index: 3, kind: output, shape index: {}]
  %s4 = sld [smem:[#allocation0]]
  $region26: #{tpu_custom_call.1} parent=0
    _
  %s6 = ssub.s32 1, %s4
  %s7 = scalar_select 0, %s6, %s4
  %8 = sst [smem:[#allocation2]] %s0
  $region1: #{tpu_custom_call.1} parent=0
    #allocation3 [shape = 'u8[2048]{0}', space=vmem, size = 0x800, scoped, tag = 'input window, operand 1, single buffered']
    #allocation4 [shape = 's32[1]{0}', space=sflag, size = 0x4, scoped, tag = 'scoped memory for tpu_custom_call.1']
    #allocation5 [shape = 's32[1]{0}', space=sflag, size = 0x4, scoped, tag = 'scoped memory for tpu_custom_call.1']
    #allocation6 [shape = 'u8[512]{0}', space=vmem, size = 0x400, scoped, tag = 'output window, operand 0, single buffered']
    %9 = vsyncpa [#allocation4], 0
    %10 = vsyncpa [#allocation5], 0
    // Predicated region
    $region2: #{tpu_custom_call.1} parent=1 // pred_check
      _
    $region3: #{tpu_custom_call.1} parent=1 // pred_check_branch
      %12 = sbr.rel (0) target = $region5
    $region4: #{tpu_custom_call.1} parent=1 // pred_region
      _
    $region5: #{tpu_custom_call.1} parent=1 // pred_fallthru
      _
    // Predicated region
    $region6: #{tpu_custom_call.1} parent=1 // pred_check
      _
    $region7: #{tpu_custom_call.1} parent=1 // pred_check_branch
      %14 = sbr.rel (0) target = $region9
    $region8: #{tpu_custom_call.1} parent=1 // pred_region
      %s16 = ssub.s32 64, 64
      %17 = vsyncadd [#allocation4], %s16
      %s19 = sshll.u32 [#allocation3], 4
      %s20 = int_to_ptr.vmem [resolvable:$true] %s19
      %22 = dma.hbm_to_vmem [thread:$0]  %s1, 64, %s20, [#allocation4]
    $region9: #{tpu_custom_call.1} parent=1 // pred_fallthru
      _
    // Predicated region
    $region10: #{tpu_custom_call.1} parent=1 // pred_check
      _
    $region11: #{tpu_custom_call.1} parent=1 // pred_check_branch
      %24 = sbr.rel (0) target = $region13
    $region12: #{tpu_custom_call.1} parent=1 // pred_region
      _
    $region13: #{tpu_custom_call.1} parent=1 // pred_fallthru
      _
    // Predicated region
    $region14: #{tpu_custom_call.1} parent=1 // pred_check
      _
    $region15: #{tpu_custom_call.1} parent=1 // pred_check_branch
      %26 = sbr.rel (0) target = $region17
    $region16: #{tpu_custom_call.1} parent=1 // pred_region
      %27 = dma.done [#allocation4], 64
    $region17: #{tpu_custom_call.1} parent=1 // pred_fallthru
      _
    %v28 = vld [vmem:[#allocation3] sm:$0xf]
    %v29 = vld [vmem:[%s2] sm:$0x1]
    %s30 = sld [smem:[#allocation2]]
    %v31 = vlaneseq
    %v32 = vshrl.u32 %v31, 7
    %v33 = vlaneseq
    %v34 = vshrl.u32 %v33, 7
    %v35 = vsub.s32 0, %v34
    %v36 = vrot.slane %v29, %v35
    %vm37 = vcmp.eq.s32.totalorder %v32, %v36
    %v38 = vsel %vm37, 1, 0
    %v39 = vcvt.s32.f32 %v38
    %v40 = vsub.f32 1.0, %v39
    %v41 = vmax.f32 %v28, 0.0
    %v42 = vadd.f32 %v41, 1.0
    %vm43 = vcmask 1043456
    %v44 = vsel %vm43, %v42, 0.0
    %v45 = vrot.slane %v44, 4
    %v46 = vadd.f32 %v44, %v45
    %v47 = vrot.slane %v46, 2
    %v48 = vadd.f32 %v46, %v47
    %v49 = vrot.slane %v48, 1
    %v50 = vadd.f32 %v48, %v49
    %v51 = vadd.f32 %v42, 1.0
    %v52 = vmul.f32 %v42, %v51
    %v53 = vadd.f32 %v51, %v42
    %v54 = vrcp.pop %v52
    %v55 = vmul.f32 %v52, %v54
    %v56 = vsub.f32 2.0, %v55
    %v57 = vmul.f32 %v54, %v56
    %v58 = vmul.f32 %v53, %v57
    %v59 = vadd.f32 %v42, 2.0
    %v60 = vrcp.pop %v59
    %v61 = vmul.f32 %v59, %v60
    %v62 = vsub.f32 2.0, %v61
    %v63 = vmul.f32 %v60, %v62
    %v64 = vmul.f32 %v63, %v63
    %v65 = vlog2.pop %v59
    %v66 = vmul.f32 %v65, 0.6931472
    %v67 = vmul.f32 %v63, 0.5
    %v68 = vsub.f32 %v66, %v67
    %v69 = vmul.f32 %v64, 0.004166667
    %v70 = vsub.f32 0.003968254, %v69
    %v71 = vmul.f32 %v64, %v70
    %v72 = vsub.f32 0.008333334, %v71
    %v73 = vmul.f32 %v64, %v72
    %v74 = vsub.f32 0.083333336, %v73
    %v75 = vmul.f32 %v64, %v74
    %v76 = vsub.f32 %v68, %v75
    %v77 = vsub.f32 %v59, 0.5
    %v78 = vmul.f32 %v77, %v66
    %v79 = vsub.f32 %v78, %v59
    %v80 = vadd.f32 %v79, 0.9189385
    %v81 = vmul.f32 %v64, 0.0005952381
    %v82 = vsub.f32 0.0007936508, %v81
    %v83 = vmul.f32 %v64, %v82
    %v84 = vsub.f32 0.0027777778, %v83
    %v85 = vmul.f32 %v64, %v84
    %v86 = vsub.f32 0.083333336, %v85
    %v87 = vmul.f32 %v63, %v86
    %v88 = vadd.f32 %v80, %v87
    %v89 = vsub.f32 %v76, %v58
    %v90 = vlog2.pop %v52
    %v91 = vmul.f32 %v90, 0.6931472
    %v92 = vsub.f32 %v88, %v91
    %v93 = vrcp.pop %v50
    %v94 = vmul.f32 %v50, %v93
    %v95 = vsub.f32 2.0, %v94
    %v96 = vmul.f32 %v93, %v95
    %v97 = vmul.f32 %v96, %v96
    %v98 = vlog2.pop %v50
    %v99 = vmul.f32 %v98, 0.6931472
    %v100 = vmul.f32 %v96, 0.5
    %v101 = vsub.f32 %v99, %v100
    %v102 = vmul.f32 %v97, 0.004166667
    %v103 = vsub.f32 0.003968254, %v102
    %v104 = vmul.f32 %v97, %v103
    %v105 = vsub.f32 0.008333334, %v104
    %v106 = vmul.f32 %v97, %v105
    %v107 = vsub.f32 0.083333336, %v106
    %v108 = vmul.f32 %v97, %v107
    %v109 = vsub.f32 %v101, %v108
    %v110 = vmul.f32 %v39, %v89
    %v111 = vsel %vm43, %v110, 0.0
    %v112 = vrot.slane %v111, 4
    %v113 = vadd.f32 %v111, %v112
    %v114 = vrot.slane %v113, 2
    %v115 = vadd.f32 %v113, %v114
    %v116 = vrot.slane %v115, 1
    %v117 = vadd.f32 %v115, %v116
    %v118 = vsub.f32 %v109, %v117
    %v119 = vmul.f32 %v41, %v40
    %v120 = vsel %vm43, %v119, 0.0
    %v121 = vrot.slane %v120, 4
    %v122 = vadd.f32 %v120, %v121
    %v123 = vrot.slane %v122, 2
    %v124 = vadd.f32 %v122, %v123
    %v125 = vrot.slane %v124, 1
    %v126 = vadd.f32 %v124, %v125
    %v127 = vadd.f32 %v126, 4.0
    %v128 = vrcp.pop %v127
    %v129 = vmul.f32 %v127, %v128
    %v130 = vsub.f32 2.0, %v129
    %v131 = vmul.f32 %v128, %v130
    %v132 = vmul.f32 %v131, %v131
    %v133 = vlog2.pop %v127
    %v134 = vmul.f32 %v133, 0.6931472
    %v135 = vmul.f32 %v131, 0.5
    %v136 = vsub.f32 %v134, %v135
    %v137 = vmul.f32 %v132, 0.004166667
    %v138 = vsub.f32 0.003968254, %v137
    %v139 = vmul.f32 %v132, %v138
    %v140 = vsub.f32 0.008333334, %v139
    %v141 = vmul.f32 %v132, %v140
    %v142 = vsub.f32 0.083333336, %v141
    %v143 = vmul.f32 %v132, %v142
    %v144 = vsub.f32 %v136, %v143
    %v145 = vsub.f32 %v127, 0.5
    %v146 = vmul.f32 %v145, %v134
    %v147 = vsub.f32 %v146, %v127
    %v148 = vadd.f32 %v147, 0.9189385
    %v149 = vmul.f32 %v132, 0.0005952381
    %v150 = vsub.f32 0.0007936508, %v149
    %v151 = vmul.f32 %v132, %v150
    %v152 = vsub.f32 0.0027777778, %v151
    %v153 = vmul.f32 %v132, %v152
    %v154 = vsub.f32 0.083333336, %v153
    %v155 = vmul.f32 %v131, %v154
    %v156 = vadd.f32 %v148, %v155
    %v157 = vmul.f32 %v40, %v92
    %v158 = vsel %vm43, %v157, 0.0
    %v159 = vrot.slane %v158, 4
    %v160 = vadd.f32 %v158, %v159
    %v161 = vrot.slane %v160, 2
    %v162 = vadd.f32 %v160, %v161
    %v163 = vrot.slane %v162, 1
    %v164 = vadd.f32 %v162, %v163
    %v165 = vsub.f32 %v156, %v164
    %v166 = vsub.f32 %v165, 1.7917595
    %v167 = vmul.f32 %v119, %v89
    %v168 = vsel %vm43, %v167, 0.0
    %v169 = vrot.slane %v168, 4
    %v170 = vadd.f32 %v168, %v169
    %v171 = vrot.slane %v170, 2
    %v172 = vadd.f32 %v170, %v171
    %v173 = vrot.slane %v172, 1
    %v174 = vadd.f32 %v172, %v173
    %v175 = vmul.f32 %v144, %v126
    %v176 = vsub.f32 %v174, %v175
    %v177 = vadd.f32 %v166, %v176
    %v178 = vstv %s30
    %v179 = vmul.f32 %v178, %v177
    %v180 = vadd.f32 %v118, %v179
    %181 = vst [vmem:[#allocation6] sm:$0x1] %v180
    // Predicated region
    $region18: #{tpu_custom_call.1} parent=1 // pred_check
      _
    $region19: #{tpu_custom_call.1} parent=1 // pred_check_branch
      %183 = sbr.rel (0) target = $region21
    $region20: #{tpu_custom_call.1} parent=1 // pred_region
      %s185 = ssub.s32 16, 16
      %186 = vsyncadd [#allocation5], %s185
      %s188 = sshll.u32 [#allocation6], 4
      %s189 = int_to_ptr.vmem [resolvable:$true] %s188
      %191 = dma.vmem_to_hbm [thread:$0]  %s189, 16, %s3, [#allocation5]
    $region21: #{tpu_custom_call.1} parent=1 // pred_fallthru
      _
    // Predicated region
    $region22: #{tpu_custom_call.1} parent=1 // pred_check
      _
    $region23: #{tpu_custom_call.1} parent=1 // pred_check_branch
      %193 = sbr.rel (0) target = $region25
    $region24: #{tpu_custom_call.1} parent=1 // pred_region
      %194 = dma.done [#allocation5], 16
    $region25: #{tpu_custom_call.1} parent=1 // pred_fallthru
      _
    %195 = vsyncpa [#allocation4], 1
    %196 = vsyncpa [#allocation5], 1

</llo_original>
